<compile_context>
chip_gen: v7x
topology: tpu7x:2x2x1
jax: 0.10.0
libtpu: 0.0.40
codegen_flags: <defaults>
</compile_context>

<pallas_src>
import jax
import jax.numpy as jnp
from jax import lax
from jax.experimental import pallas as pl
from jax.experimental.pallas import tpu as pltpu


def _round_up(n, m):
    return ((n + m - 1) // m) * m


def rnn_last_fc_kernel(x_ref, wih_ref, whh_ref, b_ref, wfc_ref, bfc_ref,
                       out_ref, xpad_ref, xproj_ref):
    """Elman RNN recurrence + final Linear, fully resident in VMEM.

    x_ref     : (T*Bp, I)   time-major, batch padded to 8 sublanes, REAL input width (no lane pad)
    wih_ref   : (Ip, Hp)    padded W_ih^T, f32
    whh_ref   : (Hp, Hp)    padded W_hh^T, bf16 (serial-path operand)
    b_ref     : (1, Hp)     padded (b_ih + b_hh), f32
    wfc_ref   : (Hp, Op)    padded W_fc^T, f32
    bfc_ref   : (1, Op)     padded b_fc, f32
    out_ref   : (Bp, Op)    lane-dense f32 output slab
    xpad_ref  : (T*Bp, Ip)  VMEM scratch: zero-extended x (pad done in-kernel, not in HBM)
    xproj_ref : (T*Bp, Hp)  VMEM scratch: hoisted input projection
    """
    Bp, _ = out_ref.shape
    TB, Hp = xproj_ref.shape
    T = TB // Bp
    I = x_ref.shape[1]

    # Zero-extend the (tiny) input inside the kernel: zero the scratch, masked-store real lanes.
    xpad_ref[...] = jnp.zeros_like(xpad_ref)
    xpad_ref[:, :I] = x_ref[...]

    # Hoisted input projection: one aligned MXU matmul off the serial chain; bias added once.
    xproj_ref[...] = (
        jnp.dot(xpad_ref[...], wih_ref[...], preferred_element_type=jnp.float32)
        + b_ref[...]
    )

    # Recurrent weight held resident as bf16 (8 vregs instead of 16 in f32).
    whh = whh_ref[...]

    def step(t, h):
        row = pl.multiple_of(t * Bp, 8)               # aligned sublane-tile start
        xt = xproj_ref[pl.ds(row, Bp), :]             # (Bp, Hp) f32, leading-axis slice
        rec = jnp.dot(h.astype(jnp.bfloat16), whh,    # bf16 operands, f32 accumulate
                      preferred_element_type=jnp.float32)
        return jnp.tanh(xt + rec)                     # carry and tanh stay f32

    h0 = jnp.zeros((Bp, Hp), jnp.float32)             # one f32 vreg row-tile at Bp=8, Hp=128
    # Bounded unroll: full scheduler visibility at small T, no program-size blowup at large T.
    h = lax.fori_loop(0, T, step, h0, unroll=8)

    # Final Linear in f32 (runs once; keeps output error dominated by the recurrence only).
    out_ref[...] = (
        jnp.dot(h, wfc_ref[...], preferred_element_type=jnp.float32) + bfc_ref[...]
    )


def rnn_forward(x, w_ih, w_hh, b_ih, b_hh, w_fc, b_fc):
    """Equivalent of RNN.forward(x): returns a flat vector of shape (batch * output_size,)."""
    B, T, I = x.shape
    H = w_hh.shape[0]
    O = w_fc.shape[0]

    # (8, 128) f32 tile padding: batch -> 8 sublanes; hidden/output -> 128 lanes.
    # NOTE: if the deployment batch can grow, pad Bp toward the MXU row count (128 on v5e,
    # 256 on v6e/v7x) before considering any grid split — one bigger per-step matmul amortizes
    # the fixed MXU fill/pop latency.
    Bp = _round_up(max(B, 1), 8)
    Ip = _round_up(I, 128)       # only the weight / in-kernel scratch use this, not the x DMA
    Hp = _round_up(H, 128)
    Op = _round_up(O, 128)

    # (B, T, I) -> time-major (T, Bp, I) with zero batch padding -> flat (T*Bp, I).
    # Lanes are NOT padded here: the x HBM buffer / DMA stays at the real input width.
    x_t = jnp.transpose(x.astype(jnp.float32), (1, 0, 2))
    x_t = jnp.pad(x_t, ((0, 0), (0, Bp - B), (0, 0)))
    x2d = x_t.reshape(T * Bp, I)

    # Pre-transpose / fuse / pad parameters (zero padding keeps the math exact).
    wih_t = jnp.pad(w_ih.T.astype(jnp.float32), ((0, Ip - I), (0, Hp - H)))     # (Ip, Hp) f32
    whh_t = jnp.pad(w_hh.T.astype(jnp.bfloat16), ((0, Hp - H), (0, Hp - H)))    # (Hp, Hp) bf16
    b = jnp.pad((b_ih + b_hh).astype(jnp.float32), (0, Hp - H)).reshape(1, Hp)  # (1, Hp)  f32
    wfc_t = jnp.pad(w_fc.T.astype(jnp.float32), ((0, Hp - H), (0, Op - O)))     # (Hp, Op) f32
    bfc = jnp.pad(b_fc.astype(jnp.float32), (0, Op - O)).reshape(1, Op)         # (1, Op)  f32

    vmem = pl.BlockSpec(memory_space=pltpu.MemorySpace.VMEM)

    # Scoped-VMEM budget from actual residency (default scoped limit is 16 MiB on v5e,
    # 32 MiB on v6e/v7x; v7x physical is 64 MiB).  Clamped to stay safe on every generation.
    est_bytes = 4 * (T * Bp * (Ip + Hp)          # xpad + xproj scratches (f32)
                     + T * Bp * Ip               # x input tile footprint (f32)
                     + Ip * Hp + Hp * Op         # W_ih^T, W_fc^T (f32)
                     + Bp * Op + 2 * Hp + Op)    # out slab + biases
    est_bytes += 2 * Hp * Hp                     # W_hh^T (bf16)
    vmem_limit = int(min(max(2 * est_bytes + (1 << 20), 4 << 20), 32 << 20))

    out = pl.pallas_call(
        rnn_last_fc_kernel,
        out_shape=jax.ShapeDtypeStruct((Bp, Op), jnp.float32),
        in_specs=[vmem] * 6,
        out_specs=vmem,
        scratch_shapes=[
            pltpu.VMEM((T * Bp, Ip), jnp.float32),   # xpad (in-kernel zero-extension of x)
            pltpu.VMEM((T * Bp, Hp), jnp.float32),   # xproj (hoisted input projection)
        ],
        compiler_params=pltpu.CompilerParams(vmem_limit_bytes=vmem_limit),
    )(x2d, wih_t, whh_t, b, wfc_t, bfc)

    return out[:B, :O].reshape(-1)


def _reference(x, w_ih, w_hh, b_ih, b_hh, w_fc, b_fc):
    B, T, _ = x.shape
    H = w_hh.shape[0]
    h = jnp.zeros((B, H), jnp.float32)
    for t in range(T):
        h = jnp.tanh(x[:, t, :] @ w_ih.T + b_ih + h @ w_hh.T + b_hh)
    return (h @ w_fc.T + b_fc).reshape(-1)


if __name__ == "__main__":
    # Small shapes consistent with the module's forward.
    batch, seq, input_size, hidden_size, output_size = 2, 8, 4, 32, 1

    key = jax.random.PRNGKey(0)
    ks = jax.random.split(key, 7)
    scale = 1.0 / jnp.sqrt(hidden_size)  # mimic PyTorch's U(-1/sqrt(H), 1/sqrt(H)) init
    x = jax.random.normal(ks[0], (batch, seq, input_size), jnp.float32)
    w_ih = jax.random.uniform(ks[1], (hidden_size, input_size), jnp.float32, -scale, scale)
    w_hh = jax.random.uniform(ks[2], (hidden_size, hidden_size), jnp.float32, -scale, scale)
    b_ih = jax.random.uniform(ks[3], (hidden_size,), jnp.float32, -scale, scale)
    b_hh = jax.random.uniform(ks[4], (hidden_size,), jnp.float32, -scale, scale)
    w_fc = jax.random.uniform(ks[5], (output_size, hidden_size), jnp.float32, -scale, scale)
    b_fc = jax.random.uniform(ks[6], (output_size,), jnp.float32, -scale, scale)

    out = rnn_forward(x, w_ih, w_hh, b_ih, b_hh, w_fc, b_fc)
    out = jax.block_until_ready(out)

    ref = _reference(x, w_ih, w_hh, b_ih, b_hh, w_fc, b_fc)
    assert out.shape == (batch * output_size,)
    # bf16 operands on the recurrent matmul (f32 accumulate/carry/tanh): tolerance loosened
    # from 1e-5 accordingly; re-validate for production T/H if they grow.
    assert jnp.allclose(out, ref, atol=2e-2, rtol=2e-2), (out, ref)

    print("KERNEL_OK")
</pallas_src>

<mosaic_0001>
module attributes {stable_mosaic.version = 11 : i64} {
  func.func @rnn_last_fc_kernel(%arg0: memref<64x4xf32, #tpu.memory_space<vmem>>, %arg1: memref<128x128xf32, #tpu.memory_space<vmem>>, %arg2: memref<128x128xbf16, #tpu.memory_space<vmem>>, %arg3: memref<1x128xf32, #tpu.memory_space<vmem>>, %arg4: memref<128x128xf32, #tpu.memory_space<vmem>>, %arg5: memref<1x128xf32, #tpu.memory_space<vmem>>, %arg6: memref<8x128xf32, #tpu.memory_space<vmem>>, %arg7: memref<64x128xf32, #tpu.memory_space<vmem>>, %arg8: memref<64x128xf32, #tpu.memory_space<vmem>>) attributes {dimension_semantics = [], scalar_prefetch = 0 : i64, scratch_operands = 2 : i64, tpu.core_type = #tpu.core_type<tc>} {
    %cst = arith.constant 0.000000e+00 : f32
    %0 = vector.broadcast %cst : f32 to vector<64x128xf32>
    %c0 = arith.constant 0 : index
    %c0_0 = arith.constant 0 : index
    %1 = vector.load %arg7[%c0, %c0_0] : memref<64x128xf32, #tpu.memory_space<vmem>>, vector<64x128xf32>
    tpu.vector_store %arg7[%c0, %c0_0], %0 {strides = array<i32>} : memref<64x128xf32, #tpu.memory_space<vmem>>, vector<64x128xf32>,
    %c0_1 = arith.constant 0 : index
    %c0_2 = arith.constant 0 : index
    %2 = vector.load %arg0[%c0_1, %c0_2] : memref<64x4xf32, #tpu.memory_space<vmem>>, vector<64x4xf32>
    %c0_3 = arith.constant 0 : index
    %c0_4 = arith.constant 0 : index
    %3 = vector.load %arg7[%c0_3, %c0_4] : memref<64x128xf32, #tpu.memory_space<vmem>>, vector<64x4xf32>
    tpu.vector_store %arg7[%c0_3, %c0_4], %2 {strides = array<i32>} : memref<64x128xf32, #tpu.memory_space<vmem>>, vector<64x4xf32>,
    %c0_5 = arith.constant 0 : index
    %c0_6 = arith.constant 0 : index
    %4 = vector.load %arg7[%c0_5, %c0_6] : memref<64x128xf32, #tpu.memory_space<vmem>>, vector<64x128xf32>
    %c0_7 = arith.constant 0 : index
    %c0_8 = arith.constant 0 : index
    %5 = vector.load %arg1[%c0_7, %c0_8] : memref<128x128xf32, #tpu.memory_space<vmem>>, vector<128x128xf32>
    %cst_9 = arith.constant dense<0.000000e+00> : vector<64x128xf32>
    %6 = tpu.matmul %4, %5, %cst_9 {dimension_numbers = #tpu.dot_dimension_numbers<[1], [0], [0], [1], [0, 0, 1, 1], [], []>} : vector<64x128xf32>, vector<128x128xf32>, vector<64x128xf32> -> vector<64x128xf32>
    %c0_10 = arith.constant 0 : index
    %c0_11 = arith.constant 0 : index
    %7 = vector.load %arg3[%c0_10, %c0_11] : memref<1x128xf32, #tpu.memory_space<vmem>>, vector<1x128xf32>
    %8 = vector.broadcast %7 : vector<1x128xf32> to vector<64x128xf32>
    %9 = arith.addf %6, %8 : vector<64x128xf32>
    %c0_12 = arith.constant 0 : index
    %c0_13 = arith.constant 0 : index
    %10 = vector.load %arg8[%c0_12, %c0_13] : memref<64x128xf32, #tpu.memory_space<vmem>>, vector<64x128xf32>
    tpu.vector_store %arg8[%c0_12, %c0_13], %9 {strides = array<i32>} : memref<64x128xf32, #tpu.memory_space<vmem>>, vector<64x128xf32>,
    %c0_14 = arith.constant 0 : index
    %c0_15 = arith.constant 0 : index
    %11 = vector.load %arg2[%c0_14, %c0_15] : memref<128x128xbf16, #tpu.memory_space<vmem>>, vector<128x128xbf16>
    %cst_16 = arith.constant 0.000000e+00 : f32
    %12 = vector.broadcast %cst_16 : f32 to vector<8x128xf32>
    %c0_i32 = arith.constant 0 : i32
    %c8_i32 = arith.constant 8 : i32
    %13 = arith.muli %c0_i32, %c8_i32 : i32
    %14 = tpu.assume_multiple %13, 8 : i32
    %15 = arith.index_cast %14 : i32 to index
    %c0_17 = arith.constant 0 : index
    %16 = vector.load %arg8[%15, %c0_17] : memref<64x128xf32, #tpu.memory_space<vmem>>, vector<8x128xf32>
    %17 = arith.truncf %12 : vector<8x128xf32> to vector<8x128xbf16>
    %cst_18 = arith.constant dense<0.000000e+00> : vector<8x128xf32>
    %18 = tpu.matmul %17, %11, %cst_18 {dimension_numbers = #tpu.dot_dimension_numbers<[1], [0], [0], [1], [0, 0, 1, 1], [], []>} : vector<8x128xbf16>, vector<128x128xbf16>, vector<8x128xf32> -> vector<8x128xf32>
    %19 = arith.addf %16, %18 : vector<8x128xf32>
    %20 = math.tanh %19 : vector<8x128xf32>
    %c1_i32 = arith.constant 1 : i32
    %c8_i32_19 = arith.constant 8 : i32
    %21 = arith.muli %c1_i32, %c8_i32_19 : i32
    %22 = tpu.assume_multiple %21, 8 : i32
    %23 = arith.index_cast %22 : i32 to index
    %c0_20 = arith.constant 0 : index
    %24 = vector.load %arg8[%23, %c0_20] : memref<64x128xf32, #tpu.memory_space<vmem>>, vector<8x128xf32>
    %25 = arith.truncf %20 : vector<8x128xf32> to vector<8x128xbf16>
    %cst_21 = arith.constant dense<0.000000e+00> : vector<8x128xf32>
    %26 = tpu.matmul %25, %11, %cst_21 {dimension_numbers = #tpu.dot_dimension_numbers<[1], [0], [0], [1], [0, 0, 1, 1], [], []>} : vector<8x128xbf16>, vector<128x128xbf16>, vector<8x128xf32> -> vector<8x128xf32>
    %27 = arith.addf %24, %26 : vector<8x128xf32>
    %28 = math.tanh %27 : vector<8x128xf32>
    %c2_i32 = arith.constant 2 : i32
    %c8_i32_22 = arith.constant 8 : i32
    %29 = arith.muli %c2_i32, %c8_i32_22 : i32
    %30 = tpu.assume_multiple %29, 8 : i32
    %31 = arith.index_cast %30 : i32 to index
    %c0_23 = arith.constant 0 : index
    %32 = vector.load %arg8[%31, %c0_23] : memref<64x128xf32, #tpu.memory_space<vmem>>, vector<8x128xf32>
    %33 = arith.truncf %28 : vector<8x128xf32> to vector<8x128xbf16>
    %cst_24 = arith.constant dense<0.000000e+00> : vector<8x128xf32>
    %34 = tpu.matmul %33, %11, %cst_24 {dimension_numbers = #tpu.dot_dimension_numbers<[1], [0], [0], [1], [0, 0, 1, 1], [], []>} : vector<8x128xbf16>, vector<128x128xbf16>, vector<8x128xf32> -> vector<8x128xf32>
    %35 = arith.addf %32, %34 : vector<8x128xf32>
    %36 = math.tanh %35 : vector<8x128xf32>
    %c3_i32 = arith.constant 3 : i32
    %c8_i32_25 = arith.constant 8 : i32
    %37 = arith.muli %c3_i32, %c8_i32_25 : i32
    %38 = tpu.assume_multiple %37, 8 : i32
    %39 = arith.index_cast %38 : i32 to index
    %c0_26 = arith.constant 0 : index
    %40 = vector.load %arg8[%39, %c0_26] : memref<64x128xf32, #tpu.memory_space<vmem>>, vector<8x128xf32>
    %41 = arith.truncf %36 : vector<8x128xf32> to vector<8x128xbf16>
    %cst_27 = arith.constant dense<0.000000e+00> : vector<8x128xf32>
    %42 = tpu.matmul %41, %11, %cst_27 {dimension_numbers = #tpu.dot_dimension_numbers<[1], [0], [0], [1], [0, 0, 1, 1], [], []>} : vector<8x128xbf16>, vector<128x128xbf16>, vector<8x128xf32> -> vector<8x128xf32>
    %43 = arith.addf %40, %42 : vector<8x128xf32>
    %44 = math.tanh %43 : vector<8x128xf32>
    %c4_i32 = arith.constant 4 : i32
    %c8_i32_28 = arith.constant 8 : i32
    %45 = arith.muli %c4_i32, %c8_i32_28 : i32
    %46 = tpu.assume_multiple %45, 8 : i32
    %47 = arith.index_cast %46 : i32 to index
    %c0_29 = arith.constant 0 : index
    %48 = vector.load %arg8[%47, %c0_29] : memref<64x128xf32, #tpu.memory_space<vmem>>, vector<8x128xf32>
    %49 = arith.truncf %44 : vector<8x128xf32> to vector<8x128xbf16>
    %cst_30 = arith.constant dense<0.000000e+00> : vector<8x128xf32>
    %50 = tpu.matmul %49, %11, %cst_30 {dimension_numbers = #tpu.dot_dimension_numbers<[1], [0], [0], [1], [0, 0, 1, 1], [], []>} : vector<8x128xbf16>, vector<128x128xbf16>, vector<8x128xf32> -> vector<8x128xf32>
    %51 = arith.addf %48, %50 : vector<8x128xf32>
    %52 = math.tanh %51 : vector<8x128xf32>
    %c5_i32 = arith.constant 5 : i32
    %c8_i32_31 = arith.constant 8 : i32
    %53 = arith.muli %c5_i32, %c8_i32_31 : i32
    %54 = tpu.assume_multiple %53, 8 : i32
    %55 = arith.index_cast %54 : i32 to index
    %c0_32 = arith.constant 0 : index
    %56 = vector.load %arg8[%55, %c0_32] : memref<64x128xf32, #tpu.memory_space<vmem>>, vector<8x128xf32>
    %57 = arith.truncf %52 : vector<8x128xf32> to vector<8x128xbf16>
    %cst_33 = arith.constant dense<0.000000e+00> : vector<8x128xf32>
    %58 = tpu.matmul %57, %11, %cst_33 {dimension_numbers = #tpu.dot_dimension_numbers<[1], [0], [0], [1], [0, 0, 1, 1], [], []>} : vector<8x128xbf16>, vector<128x128xbf16>, vector<8x128xf32> -> vector<8x128xf32>
    %59 = arith.addf %56, %58 : vector<8x128xf32>
    %60 = math.tanh %59 : vector<8x128xf32>
    %c6_i32 = arith.constant 6 : i32
    %c8_i32_34 = arith.constant 8 : i32
    %61 = arith.muli %c6_i32, %c8_i32_34 : i32
    %62 = tpu.assume_multiple %61, 8 : i32
    %63 = arith.index_cast %62 : i32 to index
    %c0_35 = arith.constant 0 : index
    %64 = vector.load %arg8[%63, %c0_35] : memref<64x128xf32, #tpu.memory_space<vmem>>, vector<8x128xf32>
    %65 = arith.truncf %60 : vector<8x128xf32> to vector<8x128xbf16>
    %cst_36 = arith.constant dense<0.000000e+00> : vector<8x128xf32>
    %66 = tpu.matmul %65, %11, %cst_36 {dimension_numbers = #tpu.dot_dimension_numbers<[1], [0], [0], [1], [0, 0, 1, 1], [], []>} : vector<8x128xbf16>, vector<128x128xbf16>, vector<8x128xf32> -> vector<8x128xf32>
    %67 = arith.addf %64, %66 : vector<8x128xf32>
    %68 = math.tanh %67 : vector<8x128xf32>
    %c7_i32 = arith.constant 7 : i32
    %c8_i32_37 = arith.constant 8 : i32
    %69 = arith.muli %c7_i32, %c8_i32_37 : i32
    %70 = tpu.assume_multiple %69, 8 : i32
    %71 = arith.index_cast %70 : i32 to index
    %c0_38 = arith.constant 0 : index
    %72 = vector.load %arg8[%71, %c0_38] : memref<64x128xf32, #tpu.memory_space<vmem>>, vector<8x128xf32>
    %73 = arith.truncf %68 : vector<8x128xf32> to vector<8x128xbf16>
    %cst_39 = arith.constant dense<0.000000e+00> : vector<8x128xf32>
    %74 = tpu.matmul %73, %11, %cst_39 {dimension_numbers = #tpu.dot_dimension_numbers<[1], [0], [0], [1], [0, 0, 1, 1], [], []>} : vector<8x128xbf16>, vector<128x128xbf16>, vector<8x128xf32> -> vector<8x128xf32>
    %75 = arith.addf %72, %74 : vector<8x128xf32>
    %76 = math.tanh %75 : vector<8x128xf32>
    %c8_i32_40 = arith.constant 8 : i32
    %c0_41 = arith.constant 0 : index
    %c0_42 = arith.constant 0 : index
    %77 = vector.load %arg4[%c0_41, %c0_42] : memref<128x128xf32, #tpu.memory_space<vmem>>, vector<128x128xf32>
    %cst_43 = arith.constant dense<0.000000e+00> : vector<8x128xf32>
    %78 = tpu.matmul %76, %77, %cst_43 {dimension_numbers = #tpu.dot_dimension_numbers<[1], [0], [0], [1], [0, 0, 1, 1], [], []>} : vector<8x128xf32>, vector<128x128xf32>, vector<8x128xf32> -> vector<8x128xf32>
    %c0_44 = arith.constant 0 : index
    %c0_45 = arith.constant 0 : index
    %79 = vector.load %arg5[%c0_44, %c0_45] : memref<1x128xf32, #tpu.memory_space<vmem>>, vector<1x128xf32>
    %80 = vector.broadcast %79 : vector<1x128xf32> to vector<8x128xf32>
    %81 = arith.addf %78, %80 : vector<8x128xf32>
    %c0_46 = arith.constant 0 : index
    %c0_47 = arith.constant 0 : index
    %82 = vector.load %arg6[%c0_46, %c0_47] : memref<8x128xf32, #tpu.memory_space<vmem>>, vector<8x128xf32>
    tpu.vector_store %arg6[%c0_46, %c0_47], %81 {strides = array<i32>} : memref<8x128xf32, #tpu.memory_space<vmem>>, vector<8x128xf32>,
    return
  }
}

</mosaic_0001>

<llo_original>
// kernel: tpu_custom_call.1
$region0: #{tpu_custom_call.1}
  #allocation0 [shape = 'u32[]', space=smem, size = 0x4, offset = 0x4, fixed_abs, tag = 'smem constant byte address 0x4 - core index']
  #allocation1 [shape = 'u32[144,128]{1,0:T(1,128)}', space=vmem, size = 0x12000, scoped, tag = 'internal scratch']
  #allocation2 [shape = 'f32[64,128]{1,0:T(8,128)}', space=vmem, size = 0x8000, scoped, tag = 'scratch operand']
  #allocation3 [shape = 'f32[64,128]{1,0:T(8,128)}', space=vmem, size = 0x8000, scoped, tag = 'scratch operand']
  %s0 = inlined_call_operand.vmem [shape: f32[64,4], index: 0, kind: input, shape index: {}]
  %s1 = inlined_call_operand.hbm [shape: f32[128,128], index: 1, kind: input, shape index: {}]
  %s2 = inlined_call_operand.vmem [shape: bf16[128,128], index: 2, kind: input, shape index: {}]
  %s3 = inlined_call_operand.vmem [shape: f32[1,128], index: 3, kind: input, shape index: {}]
  %s4 = inlined_call_operand.hbm [shape: f32[128,128], index: 4, kind: input, shape index: {}]
  %s5 = inlined_call_operand.vmem [shape: f32[1,128], index: 5, kind: input, shape index: {}]
  %s6 = inlined_call_operand.hbm [shape: f32[8,128], index: 6, kind: output, shape index: {}]
  %s7 = sld [smem:[#allocation0]]
  $region42: #{tpu_custom_call.1} parent=0
    _
  %s9 = ssub.s32 1, %s7
  %s10 = scalar_select 0, %s9, %s7
  $region1: #{tpu_custom_call.1} parent=0
    #allocation4 [shape = 'u8[65536]{0}', space=vmem, size = 0x10000, scoped, tag = 'input window, operand 1, single buffered']
    #allocation5 [shape = 's32[1]{0}', space=sflag, size = 0x4, scoped, tag = 'scoped memory for tpu_custom_call.1']
    #allocation6 [shape = 's32[1]{0}', space=sflag, size = 0x4, scoped, tag = 'scoped memory for tpu_custom_call.1']
    #allocation7 [shape = 'u8[65536]{0}', space=vmem, size = 0x10000, scoped, tag = 'input window, operand 4, single buffered']
    #allocation8 [shape = 's32[1]{0}', space=sflag, size = 0x4, scoped, tag = 'scoped memory for tpu_custom_call.1']
    #allocation9 [shape = 'u8[4096]{0}', space=vmem, size = 0x1000, scoped, tag = 'output window, operand 0, single buffered']
    %11 = vsyncpa [#allocation5], 0
    %12 = vsyncpa [#allocation8], 0
    %13 = vsyncpa [#allocation6], 0
    // Predicated region
    $region2: #{tpu_custom_call.1} parent=1 // pred_check
      _
    $region3: #{tpu_custom_call.1} parent=1 // pred_check_branch
      %15 = sbr.rel (0) target = $region5
    $region4: #{tpu_custom_call.1} parent=1 // pred_region
      _
    $region5: #{tpu_custom_call.1} parent=1 // pred_fallthru
      _
    // Predicated region
    $region6: #{tpu_custom_call.1} parent=1 // pred_check
      _
    $region7: #{tpu_custom_call.1} parent=1 // pred_check_branch
      %17 = sbr.rel (0) target = $region9
    $region8: #{tpu_custom_call.1} parent=1 // pred_region
      %s19 = ssub.s32 2048, 2048
      %20 = vsyncadd [#allocation5], %s19
      %s21 = sshll.u32 [#allocation4], 4
      %s22 = int_to_ptr.vmem [resolvable:$true] %s21
      %27 = dma.hbm_to_vmem [thread:$0]  %s1, 2048, %s22, [#allocation5], 128, 128, 8
    $region9: #{tpu_custom_call.1} parent=1 // pred_fallthru
      _
    // Predicated region
    $region10: #{tpu_custom_call.1} parent=1 // pred_check
      _
    $region11: #{tpu_custom_call.1} parent=1 // pred_check_branch
      %29 = sbr.rel (0) target = $region13
    $region12: #{tpu_custom_call.1} parent=1 // pred_region
      _
    $region13: #{tpu_custom_call.1} parent=1 // pred_fallthru
      _
    // Predicated region
    $region14: #{tpu_custom_call.1} parent=1 // pred_check
      _
    $region15: #{tpu_custom_call.1} parent=1 // pred_check_branch
      %31 = sbr.rel (0) target = $region17
    $region16: #{tpu_custom_call.1} parent=1 // pred_region
      _
    $region17: #{tpu_custom_call.1} parent=1 // pred_fallthru
      _
    // Predicated region
    $region18: #{tpu_custom_call.1} parent=1 // pred_check
      _
    $region19: #{tpu_custom_call.1} parent=1 // pred_check_branch
      %33 = sbr.rel (0) target = $region21
    $region20: #{tpu_custom_call.1} parent=1 // pred_region
      %s35 = ssub.s32 2048, 2048
      %36 = vsyncadd [#allocation8], %s35
      %s37 = sshll.u32 [#allocation7], 4
      %s38 = int_to_ptr.vmem [resolvable:$true] %s37
      %43 = dma.hbm_to_vmem [thread:$0]  %s4, 2048, %s38, [#allocation8], 128, 128, 8
    $region21: #{tpu_custom_call.1} parent=1 // pred_fallthru
      _
    // Predicated region
    $region22: #{tpu_custom_call.1} parent=1 // pred_check
      _
    $region23: #{tpu_custom_call.1} parent=1 // pred_check_branch
      %45 = sbr.rel (0) target = $region25
    $region24: #{tpu_custom_call.1} parent=1 // pred_region
      _
    $region25: #{tpu_custom_call.1} parent=1 // pred_fallthru
      _
    // Predicated region
    $region26: #{tpu_custom_call.1} parent=1 // pred_check
      _
    $region27: #{tpu_custom_call.1} parent=1 // pred_check_branch
      %47 = sbr.rel (0) target = $region29
    $region28: #{tpu_custom_call.1} parent=1 // pred_region
      %48 = dma.done [#allocation5], 2048
    $region29: #{tpu_custom_call.1} parent=1 // pred_fallthru
      _
    // Predicated region
    $region30: #{tpu_custom_call.1} parent=1 // pred_check
      _
    $region31: #{tpu_custom_call.1} parent=1 // pred_check_branch
      %50 = sbr.rel (0) target = $region33
    $region32: #{tpu_custom_call.1} parent=1 // pred_region
      %51 = dma.done [#allocation8], 2048
    $region33: #{tpu_custom_call.1} parent=1 // pred_fallthru
      _
    %53 = vst [vmem:[#allocation2] sm:$0xff] 0.0
    %54 = vst [vmem:[#allocation2 + $0x8] sm:$0xff] 0.0
    %55 = vst [vmem:[#allocation2 + $0x10] sm:$0xff] 0.0
    %56 = vst [vmem:[#allocation2 + $0x18] sm:$0xff] 0.0
    %57 = vst [vmem:[#allocation2 + $0x20] sm:$0xff] 0.0
    %58 = vst [vmem:[#allocation2 + $0x28] sm:$0xff] 0.0
    %59 = vst [vmem:[#allocation2 + $0x30] sm:$0xff] 0.0
    %60 = vst [vmem:[#allocation2 + $0x38] sm:$0xff] 0.0
    %v61 = vld [vmem:[%s0] sm:$0xff]
    %v62 = vld [vmem:[%s0 + $0x8] sm:$0xff]
    %v63 = vld [vmem:[%s0 + $0x10] sm:$0xff]
    %v64 = vld [vmem:[%s0 + $0x18] sm:$0xff]
    %v65 = vld [vmem:[%s0 + $0x20] sm:$0xff]
    %v66 = vld [vmem:[%s0 + $0x28] sm:$0xff]
    %v67 = vld [vmem:[%s0 + $0x30] sm:$0xff]
    %v68 = vld [vmem:[%s0 + $0x38] sm:$0xff]
    %vm69 = vcmask 31744
    %70 = vst.msk [vmem:[#allocation2] sm:$0xff] %vm69, %v61
    %71 = vst.msk [vmem:[#allocation2 + $0x8] sm:$0xff] %vm69, %v62
    %72 = vst.msk [vmem:[#allocation2 + $0x10] sm:$0xff] %vm69, %v63
    %73 = vst.msk [vmem:[#allocation2 + $0x18] sm:$0xff] %vm69, %v64
    %74 = vst.msk [vmem:[#allocation2 + $0x20] sm:$0xff] %vm69, %v65
    %75 = vst.msk [vmem:[#allocation2 + $0x28] sm:$0xff] %vm69, %v66
    %76 = vst.msk [vmem:[#allocation2 + $0x30] sm:$0xff] %vm69, %v67
    %77 = vst.msk [vmem:[#allocation2 + $0x38] sm:$0xff] %vm69, %v68
    %v78 = vld [vmem:[#allocation2] sm:$0xff]
    %v79 = vld [vmem:[#allocation2 + $0x8] sm:$0xff]
    %v80 = vld [vmem:[#allocation2 + $0x10] sm:$0xff]
    %v81 = vld [vmem:[#allocation2 + $0x18] sm:$0xff]
    %v82 = vld [vmem:[#allocation2 + $0x20] sm:$0xff]
    %v83 = vld [vmem:[#allocation2 + $0x28] sm:$0xff]
    %v84 = vld [vmem:[#allocation2 + $0x30] sm:$0xff]
    %v85 = vld [vmem:[#allocation2 + $0x38] sm:$0xff]
    %v86 = vld [vmem:[#allocation4] sm:$0xff]
    %v87 = vld [vmem:[#allocation4 + $0x8] sm:$0xff]
    %v88 = vld [vmem:[#allocation4 + $0x10] sm:$0xff]
    %v89 = vld [vmem:[#allocation4 + $0x18] sm:$0xff]
    %v90 = vld [vmem:[#allocation4 + $0x20] sm:$0xff]
    %v91 = vld [vmem:[#allocation4 + $0x28] sm:$0xff]
    %v92 = vld [vmem:[#allocation4 + $0x30] sm:$0xff]
    %v93 = vld [vmem:[#allocation4 + $0x38] sm:$0xff]
    %v94 = vld [vmem:[#allocation4 + $0x40] sm:$0xff]
    %v95 = vld [vmem:[#allocation4 + $0x48] sm:$0xff]
    %v96 = vld [vmem:[#allocation4 + $0x50] sm:$0xff]
    %v97 = vld [vmem:[#allocation4 + $0x58] sm:$0xff]
    %v98 = vld [vmem:[#allocation4 + $0x60] sm:$0xff]
    %v99 = vld [vmem:[#allocation4 + $0x68] sm:$0xff]
    %v100 = vld [vmem:[#allocation4 + $0x70] sm:$0xff]
    %v101 = vld [vmem:[#allocation4 + $0x78] sm:$0xff]
    %v102 = vld [vmem:[%s3] sm:$0x1]
    %v104 = vlaneseq
    %v105 = vshrl.u32 %v104, 7
    %v106 = vsub.s32 0, %v105
    %v107 = vrot.slane %v102, %v106
    %109 = vmatprep.subr.mxu0 0.0
    %110 = vmatpush1.msra.mxu0 %v86
    %111 = vmatprep.subr.mxu0 0.0
    %112 = vmatpush1.msra.mxu0 %v87
    %113 = vmatprep.subr.mxu0 0.0
    %114 = vmatpush1.msra.mxu0 %v88
    %115 = vmatprep.subr.mxu0 0.0
    %116 = vmatpush1.msra.mxu0 %v89
    %117 = vmatprep.subr.mxu0 0.0
    %118 = vmatpush1.msra.mxu0 %v90
    %119 = vmatprep.subr.mxu0 0.0
    %120 = vmatpush1.msra.mxu0 %v91
    %121 = vmatprep.subr.mxu0 0.0
    %122 = vmatpush1.msra.mxu0 %v92
    %123 = vmatprep.subr.mxu0 0.0
    %124 = vmatpush1.msra.mxu0 %v93
    %125 = vmatprep.subr.mxu0 0.0
    %126 = vmatpush1.msra.mxu0 %v94
    %127 = vmatprep.subr.mxu0 0.0
    %128 = vmatpush1.msra.mxu0 %v95
    %129 = vmatprep.subr.mxu0 0.0
    %130 = vmatpush1.msra.mxu0 %v96
    %131 = vmatprep.subr.mxu0 0.0
    %132 = vmatpush1.msra.mxu0 %v97
    %133 = vmatprep.subr.mxu0 0.0
    %134 = vmatpush1.msra.mxu0 %v98
    %135 = vmatprep.subr.mxu0 0.0
    %136 = vmatpush1.msra.mxu0 %v99
    %137 = vmatprep.subr.mxu0 0.0
    %138 = vmatpush1.msra.mxu0 %v100
    %139 = vmatprep.subr.mxu0 0.0
    %140 = vmatpush1.msra.mxu0 %v101
    %141 = vmatprep.subr.mxu0 0.0
    %142 = vmatpush1.msra.mxu0 0.0
    %143 = vmatprep.subr.mxu0 0.0
    %144 = vmatpush1.msra.mxu0 0.0
    %145 = vmatprep.subr.mxu0 0.0
    %146 = vmatpush1.msra.mxu0 0.0
    %147 = vmatprep.subr.mxu0 0.0
    %148 = vmatpush1.msra.mxu0 0.0
    %149 = vmatprep.subr.mxu0 0.0
    %150 = vmatpush1.msra.mxu0 0.0
    %151 = vmatprep.subr.mxu0 0.0
    %152 = vmatpush1.msra.mxu0 0.0
    %153 = vmatprep.subr.mxu0 0.0
    %154 = vmatpush1.msra.mxu0 0.0
    %155 = vmatprep.subr.mxu0 0.0
    %156 = vmatpush1.msra.mxu0 0.0
    %157 = vmatprep.subr.mxu0 0.0
    %158 = vmatpush1.msra.mxu0 0.0
    %159 = vmatprep.subr.mxu0 0.0
    %160 = vmatpush1.msra.mxu0 0.0
    %161 = vmatprep.subr.mxu0 0.0
    %162 = vmatpush1.msra.mxu0 0.0
    %163 = vmatprep.subr.mxu0 0.0
    %164 = vmatpush1.msra.mxu0 0.0
    %165 = vmatprep.subr.mxu0 0.0
    %166 = vmatpush1.msra.mxu0 0.0
    %167 = vmatprep.subr.mxu0 0.0
    %168 = vmatpush1.msra.mxu0 0.0
    %169 = vmatprep.subr.mxu0 0.0
    %170 = vmatpush1.msra.mxu0 0.0
    %171 = vmatprep.subr.mxu0 0.0
    %172 = vmatpush1.msra.mxu0 0.0
    %173 = vmatprep.mubr.f32.mxu0 0.0
    %174 = vmatmul.mubr.f32.gmra.mrb[0].mxu0 %v78
    %v175 = vpop.f32.mrb[0].mxu0
    %v176 = vadd.f32 %v107, %v175
    %v177 = vpop.f32.mrb[0].mxu0
    %178 = vmatprep.mubr.f32.mxu0 0.0
    %179 = vmatmul.mubr.f32.gmra.mrb[0].mxu0 %v79
    %v180 = vpop.f32.mrb[0].mxu0
    %v181 = vadd.f32 %v107, %v180
    %v182 = vpop.f32.mrb[0].mxu0
    %183 = vmatprep.mubr.f32.mxu0 0.0
    %184 = vmatmul.mubr.f32.gmra.mrb[0].mxu0 %v80
    %v185 = vpop.f32.mrb[0].mxu0
    %v186 = vadd.f32 %v107, %v185
    %v187 = vpop.f32.mrb[0].mxu0
    %188 = vmatprep.mubr.f32.mxu0 0.0
    %189 = vmatmul.mubr.f32.gmra.mrb[0].mxu0 %v81
    %v190 = vpop.f32.mrb[0].mxu0
    %v191 = vadd.f32 %v107, %v190
    %v192 = vpop.f32.mrb[0].mxu0
    %193 = vmatprep.mubr.f32.mxu0 0.0
    %194 = vmatmul.mubr.f32.gmra.mrb[0].mxu0 %v82
    %v195 = vpop.f32.mrb[0].mxu0
    %v196 = vadd.f32 %v107, %v195
    %v197 = vpop.f32.mrb[0].mxu0
    %198 = vmatprep.mubr.f32.mxu0 0.0
    %199 = vmatmul.mubr.f32.gmra.mrb[0].mxu0 %v83
    %v200 = vpop.f32.mrb[0].mxu0
    %v201 = vadd.f32 %v107, %v200
    %v202 = vpop.f32.mrb[0].mxu0
    %203 = vmatprep.mubr.f32.mxu0 0.0
    %204 = vmatmul.mubr.f32.gmra.mrb[0].mxu0 %v84
    %v205 = vpop.f32.mrb[0].mxu0
    %v206 = vadd.f32 %v107, %v205
    %v207 = vpop.f32.mrb[0].mxu0
    %208 = vmatprep.mubr.f32.mxu0 0.0
    %209 = vmatmul.mubr.f32.gmra.mrb[0].mxu0 %v85
    %v210 = vpop.f32.mrb[0].mxu0
    %v211 = vadd.f32 %v107, %v210
    %v212 = vpop.f32.mrb[0].mxu0
    %213 = vdwg.mxu0
    %214 = vst [vmem:[#allocation3] sm:$0xff] %v176
    %215 = vst [vmem:[#allocation3 + $0x8] sm:$0xff] %v181
    %216 = vst [vmem:[#allocation3 + $0x10] sm:$0xff] %v186
    %217 = vst [vmem:[#allocation3 + $0x18] sm:$0xff] %v191
    %218 = vst [vmem:[#allocation3 + $0x20] sm:$0xff] %v196
    %219 = vst [vmem:[#allocation3 + $0x28] sm:$0xff] %v201
    %220 = vst [vmem:[#allocation3 + $0x30] sm:$0xff] %v206
    %221 = vst [vmem:[#allocation3 + $0x38] sm:$0xff] %v211
    %v222 = vld [vmem:[%s2] sm:$0xf]
    %v223 = vld [vmem:[%s2 + $0x4] sm:$0xf]
    %v224 = vld [vmem:[%s2 + $0x8] sm:$0xf]
    %v225 = vld [vmem:[%s2 + $0xc] sm:$0xf]
    %v226 = vld [vmem:[%s2 + $0x10] sm:$0xf]
    %v227 = vld [vmem:[%s2 + $0x14] sm:$0xf]
    %v228 = vld [vmem:[%s2 + $0x18] sm:$0xf]
    %v229 = vld [vmem:[%s2 + $0x1c] sm:$0xf]
    %v230 = vld [vmem:[%s2 + $0x20] sm:$0xf]
    %v231 = vld [vmem:[%s2 + $0x24] sm:$0xf]
    %v232 = vld [vmem:[%s2 + $0x28] sm:$0xf]
    %v233 = vld [vmem:[%s2 + $0x2c] sm:$0xf]
    %v234 = vld [vmem:[%s2 + $0x30] sm:$0xf]
    %v235 = vld [vmem:[%s2 + $0x34] sm:$0xf]
    %v236 = vld [vmem:[%s2 + $0x38] sm:$0xf]
    %v237 = vld [vmem:[%s2 + $0x3c] sm:$0xf]
    %v238 = vld [vmem:[#allocation3] sm:$0xff]
    %v255 = vunpack.c.l.b16 %v222
    %v256 = vunpack.c.l.b16 %v223
    %v257 = vunpack.c.l.b16 %v224
    %v258 = vunpack.c.l.b16 %v225
    %v259 = vunpack.c.l.b16 %v226
    %v260 = vunpack.c.l.b16 %v227
    %v261 = vunpack.c.l.b16 %v228
    %v262 = vunpack.c.l.b16 %v229
    %v263 = vunpack.c.l.b16 %v230
    %v264 = vunpack.c.l.b16 %v231
    %v265 = vunpack.c.l.b16 %v232
    %v266 = vunpack.c.l.b16 %v233
    %v267 = vunpack.c.l.b16 %v234
    %v268 = vunpack.c.l.b16 %v235
    %v269 = vunpack.c.l.b16 %v236
    %v270 = vunpack.c.l.b16 %v237
    %v271 = vpack.c.b16 %v256, %v255
    %v272 = vpack.c.b16 %v258, %v257
    %v273 = vpack.c.b16 %v260, %v259
    %v274 = vpack.c.b16 %v262, %v261
    %v275 = vpack.c.b16 %v264, %v263
    %v276 = vpack.c.b16 %v266, %v265
    %v277 = vpack.c.b16 %v268, %v267
    %v278 = vpack.c.b16 %v270, %v269
    %287 = vmatprep.subr.bf16.mxu0 0
    %288 = vmatpush1.bf16.msra.mxu0 %v271
    %289 = vmatprep.subr.bf16.mxu0 0
    %290 = vmatpush1.bf16.msra.mxu0 %v272
    %291 = vmatprep.subr.bf16.mxu0 0
    %292 = vmatpush1.bf16.msra.mxu0 %v273
    %293 = vmatprep.subr.bf16.mxu0 0
    %294 = vmatpush1.bf16.msra.mxu0 %v274
    %295 = vmatprep.subr.bf16.mxu0 0
    %296 = vmatpush1.bf16.msra.mxu0 %v275
    %297 = vmatprep.subr.bf16.mxu0 0
    %298 = vmatpush1.bf16.msra.mxu0 %v276
    %299 = vmatprep.subr.bf16.mxu0 0
    %300 = vmatpush1.bf16.msra.mxu0 %v277
    %301 = vmatprep.subr.bf16.mxu0 0
    %302 = vmatpush1.bf16.msra.mxu0 %v278
    %303 = vmatprep.subr.bf16.mxu0 0
    %304 = vmatpush1.bf16.msra.mxu0 0
    %305 = vmatprep.subr.bf16.mxu0 0
    %306 = vmatpush1.bf16.msra.mxu0 0
    %307 = vmatprep.subr.bf16.mxu0 0
    %308 = vmatpush1.bf16.msra.mxu0 0
    %309 = vmatprep.subr.bf16.mxu0 0
    %310 = vmatpush1.bf16.msra.mxu0 0
    %311 = vmatprep.subr.bf16.mxu0 0
    %312 = vmatpush1.bf16.msra.mxu0 0
    %313 = vmatprep.subr.bf16.mxu0 0
    %314 = vmatpush1.bf16.msra.mxu0 0
    %315 = vmatprep.subr.bf16.mxu0 0
    %316 = vmatpush1.bf16.msra.mxu0 0
    %317 = vmatprep.subr.bf16.mxu0 0
    %318 = vmatpush1.bf16.msra.mxu0 0
    %319 = vmatprep.mubr.bf16.mxu0 0
    %320 = vmatmul.mubr.bf16.gmra.mrb[0].mxu0 0
    %v321 = vpop.f32.mrb[0].mxu0
    %v322 = vadd.f32 0.0, %v321
    %v323 = vpop.f32.mrb[0].mxu0
    %v324 = vpop.f32.mrb[0].mxu0
    %v325 = vpop.f32.mrb[0].mxu0
    %326 = vdwg.mxu0
    %v327 = vadd.f32 %v238, %v322
    %v328 = vtanh.pop %v327
    %s329 = scalar_lea.vmem [#allocation3], 8
    %v330 = vld [vmem:[%s329] sm:$0xff]
    %v331 = vpack.c.bf16 %v328, %v328
    %332 = vmatprep.subr.bf16.mxu0 0
    %333 = vmatpush1.bf16.msra.mxu0 %v271
    %334 = vmatprep.subr.bf16.mxu0 0
    %335 = vmatpush1.bf16.msra.mxu0 %v272
    %336 = vmatprep.subr.bf16.mxu0 0
    %337 = vmatpush1.bf16.msra.mxu0 %v273
    %338 = vmatprep.subr.bf16.mxu0 0
    %339 = vmatpush1.bf16.msra.mxu0 %v274
    %340 = vmatprep.subr.bf16.mxu0 0
    %341 = vmatpush1.bf16.msra.mxu0 %v275
    %342 = vmatprep.subr.bf16.mxu0 0
    %343 = vmatpush1.bf16.msra.mxu0 %v276
    %344 = vmatprep.subr.bf16.mxu0 0
    %345 = vmatpush1.bf16.msra.mxu0 %v277
    %346 = vmatprep.subr.bf16.mxu0 0
    %347 = vmatpush1.bf16.msra.mxu0 %v278
    %348 = vmatprep.subr.bf16.mxu0 0
    %349 = vmatpush1.bf16.msra.mxu0 0
    %350 = vmatprep.subr.bf16.mxu0 0
    %351 = vmatpush1.bf16.msra.mxu0 0
    %352 = vmatprep.subr.bf16.mxu0 0
    %353 = vmatpush1.bf16.msra.mxu0 0
    %354 = vmatprep.subr.bf16.mxu0 0
    %355 = vmatpush1.bf16.msra.mxu0 0
    %356 = vmatprep.subr.bf16.mxu0 0
    %357 = vmatpush1.bf16.msra.mxu0 0
    %358 = vmatprep.subr.bf16.mxu0 0
    %359 = vmatpush1.bf16.msra.mxu0 0
    %360 = vmatprep.subr.bf16.mxu0 0
    %361 = vmatpush1.bf16.msra.mxu0 0
    %362 = vmatprep.subr.bf16.mxu0 0
    %363 = vmatpush1.bf16.msra.mxu0 0
    %364 = vmatprep.mubr.bf16.mxu0 0
    %365 = vmatmul.mubr.bf16.gmra.mrb[0].mxu0 %v331
    %v366 = vpop.f32.mrb[0].mxu0
    %v367 = vadd.f32 0.0, %v366
    %v368 = vpop.f32.mrb[0].mxu0
    %v369 = vpop.f32.mrb[0].mxu0
    %v370 = vpop.f32.mrb[0].mxu0
    %371 = vdwg.mxu0
    %v372 = vadd.f32 %v330, %v367
    %v373 = vtanh.pop %v372
    %s374 = scalar_lea.vmem [#allocation3], 16
    %v375 = vld [vmem:[%s374] sm:$0xff]
    %v376 = vpack.c.bf16 %v373, %v373
    %377 = vmatprep.subr.bf16.mxu0 0
    %378 = vmatpush1.bf16.msra.mxu0 %v271
    %379 = vmatprep.subr.bf16.mxu0 0
    %380 = vmatpush1.bf16.msra.mxu0 %v272
    %381 = vmatprep.subr.bf16.mxu0 0
    %382 = vmatpush1.bf16.msra.mxu0 %v273
    %383 = vmatprep.subr.bf16.mxu0 0
    %384 = vmatpush1.bf16.msra.mxu0 %v274
    %385 = vmatprep.subr.bf16.mxu0 0
    %386 = vmatpush1.bf16.msra.mxu0 %v275
    %387 = vmatprep.subr.bf16.mxu0 0
    %388 = vmatpush1.bf16.msra.mxu0 %v276
    %389 = vmatprep.subr.bf16.mxu0 0
    %390 = vmatpush1.bf16.msra.mxu0 %v277
    %391 = vmatprep.subr.bf16.mxu0 0
    %392 = vmatpush1.bf16.msra.mxu0 %v278
    %393 = vmatprep.subr.bf16.mxu0 0
    %394 = vmatpush1.bf16.msra.mxu0 0
    %395 = vmatprep.subr.bf16.mxu0 0
    %396 = vmatpush1.bf16.msra.mxu0 0
    %397 = vmatprep.subr.bf16.mxu0 0
    %398 = vmatpush1.bf16.msra.mxu0 0
    %399 = vmatprep.subr.bf16.mxu0 0
    %400 = vmatpush1.bf16.msra.mxu0 0
    %401 = vmatprep.subr.bf16.mxu0 0
    %402 = vmatpush1.bf16.msra.mxu0 0
    %403 = vmatprep.subr.bf16.mxu0 0
    %404 = vmatpush1.bf16.msra.mxu0 0
    %405 = vmatprep.subr.bf16.mxu0 0
    %406 = vmatpush1.bf16.msra.mxu0 0
    %407 = vmatprep.subr.bf16.mxu0 0
    %408 = vmatpush1.bf16.msra.mxu0 0
    %409 = vmatprep.mubr.bf16.mxu0 0
    %410 = vmatmul.mubr.bf16.gmra.mrb[0].mxu0 %v376
    %v411 = vpop.f32.mrb[0].mxu0
    %v412 = vadd.f32 0.0, %v411
    %v413 = vpop.f32.mrb[0].mxu0
    %v414 = vpop.f32.mrb[0].mxu0
    %v415 = vpop.f32.mrb[0].mxu0
    %416 = vdwg.mxu0
    %v417 = vadd.f32 %v375, %v412
    %v418 = vtanh.pop %v417
    %s419 = scalar_lea.vmem [#allocation3], 24
    %v420 = vld [vmem:[%s419] sm:$0xff]
    %v421 = vpack.c.bf16 %v418, %v418
    %422 = vmatprep.subr.bf16.mxu0 0
    %423 = vmatpush1.bf16.msra.mxu0 %v271
    %424 = vmatprep.subr.bf16.mxu0 0
    %425 = vmatpush1.bf16.msra.mxu0 %v272
    %426 = vmatprep.subr.bf16.mxu0 0
    %427 = vmatpush1.bf16.msra.mxu0 %v273
    %428 = vmatprep.subr.bf16.mxu0 0
    %429 = vmatpush1.bf16.msra.mxu0 %v274
    %430 = vmatprep.subr.bf16.mxu0 0
    %431 = vmatpush1.bf16.msra.mxu0 %v275
    %432 = vmatprep.subr.bf16.mxu0 0
    %433 = vmatpush1.bf16.msra.mxu0 %v276
    %434 = vmatprep.subr.bf16.mxu0 0
    %435 = vmatpush1.bf16.msra.mxu0 %v277
    %436 = vmatprep.subr.bf16.mxu0 0
    %437 = vmatpush1.bf16.msra.mxu0 %v278
    %438 = vmatprep.subr.bf16.mxu0 0
    %439 = vmatpush1.bf16.msra.mxu0 0
    %440 = vmatprep.subr.bf16.mxu0 0
    %441 = vmatpush1.bf16.msra.mxu0 0
    %442 = vmatprep.subr.bf16.mxu0 0
    %443 = vmatpush1.bf16.msra.mxu0 0
    %444 = vmatprep.subr.bf16.mxu0 0
    %445 = vmatpush1.bf16.msra.mxu0 0
    %446 = vmatprep.subr.bf16.mxu0 0
    %447 = vmatpush1.bf16.msra.mxu0 0
    %448 = vmatprep.subr.bf16.mxu0 0
    %449 = vmatpush1.bf16.msra.mxu0 0
    %450 = vmatprep.subr.bf16.mxu0 0
    %451 = vmatpush1.bf16.msra.mxu0 0
    %452 = vmatprep.subr.bf16.mxu0 0
    %453 = vmatpush1.bf16.msra.mxu0 0
    %454 = vmatprep.mubr.bf16.mxu0 0
    %455 = vmatmul.mubr.bf16.gmra.mrb[0].mxu0 %v421
    %v456 = vpop.f32.mrb[0].mxu0
    %v457 = vadd.f32 0.0, %v456
    %v458 = vpop.f32.mrb[0].mxu0
    %v459 = vpop.f32.mrb[0].mxu0
    %v460 = vpop.f32.mrb[0].mxu0
    %461 = vdwg.mxu0
    %v462 = vadd.f32 %v420, %v457
    %v463 = vtanh.pop %v462
    %s464 = scalar_lea.vmem [#allocation3], 32
    %v465 = vld [vmem:[%s464] sm:$0xff]
    %v466 = vpack.c.bf16 %v463, %v463
    %467 = vmatprep.subr.bf16.mxu0 0
    %468 = vmatpush1.bf16.msra.mxu0 %v271
    %469 = vmatprep.subr.bf16.mxu0 0
    %470 = vmatpush1.bf16.msra.mxu0 %v272
    %471 = vmatprep.subr.bf16.mxu0 0
    %472 = vmatpush1.bf16.msra.mxu0 %v273
    %473 = vmatprep.subr.bf16.mxu0 0
    %474 = vmatpush1.bf16.msra.mxu0 %v274
    %475 = vmatprep.subr.bf16.mxu0 0
    %476 = vmatpush1.bf16.msra.mxu0 %v275
    %477 = vmatprep.subr.bf16.mxu0 0
    %478 = vmatpush1.bf16.msra.mxu0 %v276
    %479 = vmatprep.subr.bf16.mxu0 0
    %480 = vmatpush1.bf16.msra.mxu0 %v277
    %481 = vmatprep.subr.bf16.mxu0 0
    %482 = vmatpush1.bf16.msra.mxu0 %v278
    %483 = vmatprep.subr.bf16.mxu0 0
    %484 = vmatpush1.bf16.msra.mxu0 0
    %485 = vmatprep.subr.bf16.mxu0 0
    %486 = vmatpush1.bf16.msra.mxu0 0
    %487 = vmatprep.subr.bf16.mxu0 0
    %488 = vmatpush1.bf16.msra.mxu0 0
    %489 = vmatprep.subr.bf16.mxu0 0
    %490 = vmatpush1.bf16.msra.mxu0 0
    %491 = vmatprep.subr.bf16.mxu0 0
    %492 = vmatpush1.bf16.msra.mxu0 0
    %493 = vmatprep.subr.bf16.mxu0 0
    %494 = vmatpush1.bf16.msra.mxu0 0
    %495 = vmatprep.subr.bf16.mxu0 0
    %496 = vmatpush1.bf16.msra.mxu0 0
    %497 = vmatprep.subr.bf16.mxu0 0
    %498 = vmatpush1.bf16.msra.mxu0 0
    %499 = vmatprep.mubr.bf16.mxu0 0
    %500 = vmatmul.mubr.bf16.gmra.mrb[0].mxu0 %v466
    %v501 = vpop.f32.mrb[0].mxu0
    %v502 = vadd.f32 0.0, %v501
    %v503 = vpop.f32.mrb[0].mxu0
    %v504 = vpop.f32.mrb[0].mxu0
    %v505 = vpop.f32.mrb[0].mxu0
    %506 = vdwg.mxu0
    %v507 = vadd.f32 %v465, %v502
    %v508 = vtanh.pop %v507
    %s509 = scalar_lea.vmem [#allocation3], 40
    %v510 = vld [vmem:[%s509] sm:$0xff]
    %v511 = vpack.c.bf16 %v508, %v508
    %512 = vmatprep.subr.bf16.mxu0 0
    %513 = vmatpush1.bf16.msra.mxu0 %v271
    %514 = vmatprep.subr.bf16.mxu0 0
    %515 = vmatpush1.bf16.msra.mxu0 %v272
    %516 = vmatprep.subr.bf16.mxu0 0
    %517 = vmatpush1.bf16.msra.mxu0 %v273
    %518 = vmatprep.subr.bf16.mxu0 0
    %519 = vmatpush1.bf16.msra.mxu0 %v274
    %520 = vmatprep.subr.bf16.mxu0 0
    %521 = vmatpush1.bf16.msra.mxu0 %v275
    %522 = vmatprep.subr.bf16.mxu0 0
    %523 = vmatpush1.bf16.msra.mxu0 %v276
    %524 = vmatprep.subr.bf16.mxu0 0
    %525 = vmatpush1.bf16.msra.mxu0 %v277
    %526 = vmatprep.subr.bf16.mxu0 0
    %527 = vmatpush1.bf16.msra.mxu0 %v278
    %528 = vmatprep.subr.bf16.mxu0 0
    %529 = vmatpush1.bf16.msra.mxu0 0
    %530 = vmatprep.subr.bf16.mxu0 0
    %531 = vmatpush1.bf16.msra.mxu0 0
    %532 = vmatprep.subr.bf16.mxu0 0
    %533 = vmatpush1.bf16.msra.mxu0 0
    %534 = vmatprep.subr.bf16.mxu0 0
    %535 = vmatpush1.bf16.msra.mxu0 0
    %536 = vmatprep.subr.bf16.mxu0 0
    %537 = vmatpush1.bf16.msra.mxu0 0
    %538 = vmatprep.subr.bf16.mxu0 0
    %539 = vmatpush1.bf16.msra.mxu0 0
    %540 = vmatprep.subr.bf16.mxu0 0
    %541 = vmatpush1.bf16.msra.mxu0 0
    %542 = vmatprep.subr.bf16.mxu0 0
    %543 = vmatpush1.bf16.msra.mxu0 0
    %544 = vmatprep.mubr.bf16.mxu0 0
    %545 = vmatmul.mubr.bf16.gmra.mrb[0].mxu0 %v511
    %v546 = vpop.f32.mrb[0].mxu0
    %v547 = vadd.f32 0.0, %v546
    %v548 = vpop.f32.mrb[0].mxu0
    %v549 = vpop.f32.mrb[0].mxu0
    %v550 = vpop.f32.mrb[0].mxu0
    %551 = vdwg.mxu0
    %v552 = vadd.f32 %v510, %v547
    %v553 = vtanh.pop %v552
    %s554 = scalar_lea.vmem [#allocation3], 48
    %v555 = vld [vmem:[%s554] sm:$0xff]
    %v556 = vpack.c.bf16 %v553, %v553
    %557 = vmatprep.subr.bf16.mxu0 0
    %558 = vmatpush1.bf16.msra.mxu0 %v271
    %559 = vmatprep.subr.bf16.mxu0 0
    %560 = vmatpush1.bf16.msra.mxu0 %v272
    %561 = vmatprep.subr.bf16.mxu0 0
    %562 = vmatpush1.bf16.msra.mxu0 %v273
    %563 = vmatprep.subr.bf16.mxu0 0
    %564 = vmatpush1.bf16.msra.mxu0 %v274
    %565 = vmatprep.subr.bf16.mxu0 0
    %566 = vmatpush1.bf16.msra.mxu0 %v275
    %567 = vmatprep.subr.bf16.mxu0 0
    %568 = vmatpush1.bf16.msra.mxu0 %v276
    %569 = vmatprep.subr.bf16.mxu0 0
    %570 = vmatpush1.bf16.msra.mxu0 %v277
    %571 = vmatprep.subr.bf16.mxu0 0
    %572 = vmatpush1.bf16.msra.mxu0 %v278
    %573 = vmatprep.subr.bf16.mxu0 0
    %574 = vmatpush1.bf16.msra.mxu0 0
    %575 = vmatprep.subr.bf16.mxu0 0
    %576 = vmatpush1.bf16.msra.mxu0 0
    %577 = vmatprep.subr.bf16.mxu0 0
    %578 = vmatpush1.bf16.msra.mxu0 0
    %579 = vmatprep.subr.bf16.mxu0 0
    %580 = vmatpush1.bf16.msra.mxu0 0
    %581 = vmatprep.subr.bf16.mxu0 0
    %582 = vmatpush1.bf16.msra.mxu0 0
    %583 = vmatprep.subr.bf16.mxu0 0
    %584 = vmatpush1.bf16.msra.mxu0 0
    %585 = vmatprep.subr.bf16.mxu0 0
    %586 = vmatpush1.bf16.msra.mxu0 0
    %587 = vmatprep.subr.bf16.mxu0 0
    %588 = vmatpush1.bf16.msra.mxu0 0
    %589 = vmatprep.mubr.bf16.mxu0 0
    %590 = vmatmul.mubr.bf16.gmra.mrb[0].mxu0 %v556
    %v591 = vpop.f32.mrb[0].mxu0
    %v592 = vadd.f32 0.0, %v591
    %v593 = vpop.f32.mrb[0].mxu0
    %v594 = vpop.f32.mrb[0].mxu0
    %v595 = vpop.f32.mrb[0].mxu0
    %596 = vdwg.mxu0
    %v597 = vadd.f32 %v555, %v592
    %v598 = vtanh.pop %v597
    %s599 = scalar_lea.vmem [#allocation3], 56
    %v600 = vld [vmem:[%s599] sm:$0xff]
    %v601 = vpack.c.bf16 %v598, %v598
    %602 = vmatprep.subr.bf16.mxu0 0
    %603 = vmatpush1.bf16.msra.mxu0 %v271
    %604 = vmatprep.subr.bf16.mxu0 0
    %605 = vmatpush1.bf16.msra.mxu0 %v272
    %606 = vmatprep.subr.bf16.mxu0 0
    %607 = vmatpush1.bf16.msra.mxu0 %v273
    %608 = vmatprep.subr.bf16.mxu0 0
    %609 = vmatpush1.bf16.msra.mxu0 %v274
    %610 = vmatprep.subr.bf16.mxu0 0
    %611 = vmatpush1.bf16.msra.mxu0 %v275
    %612 = vmatprep.subr.bf16.mxu0 0
    %613 = vmatpush1.bf16.msra.mxu0 %v276
    %614 = vmatprep.subr.bf16.mxu0 0
    %615 = vmatpush1.bf16.msra.mxu0 %v277
    %616 = vmatprep.subr.bf16.mxu0 0
    %617 = vmatpush1.bf16.msra.mxu0 %v278
    %618 = vmatprep.subr.bf16.mxu0 0
    %619 = vmatpush1.bf16.msra.mxu0 0
    %620 = vmatprep.subr.bf16.mxu0 0
    %621 = vmatpush1.bf16.msra.mxu0 0
    %622 = vmatprep.subr.bf16.mxu0 0
    %623 = vmatpush1.bf16.msra.mxu0 0
    %624 = vmatprep.subr.bf16.mxu0 0
    %625 = vmatpush1.bf16.msra.mxu0 0
    %626 = vmatprep.subr.bf16.mxu0 0
    %627 = vmatpush1.bf16.msra.mxu0 0
    %628 = vmatprep.subr.bf16.mxu0 0
    %629 = vmatpush1.bf16.msra.mxu0 0
    %630 = vmatprep.subr.bf16.mxu0 0
    %631 = vmatpush1.bf16.msra.mxu0 0
    %632 = vmatprep.subr.bf16.mxu0 0
    %633 = vmatpush1.bf16.msra.mxu0 0
    %634 = vmatprep.mubr.bf16.mxu0 0
    %635 = vmatmul.mubr.bf16.gmra.mrb[0].mxu0 %v601
    %v636 = vpop.f32.mrb[0].mxu0
    %v637 = vadd.f32 0.0, %v636
    %v638 = vpop.f32.mrb[0].mxu0
    %v639 = vpop.f32.mrb[0].mxu0
    %v640 = vpop.f32.mrb[0].mxu0
    %641 = vdwg.mxu0
    %v642 = vadd.f32 %v600, %v637
    %v643 = vtanh.pop %v642
    %v644 = vld [vmem:[#allocation7] sm:$0xff]
    %v645 = vld [vmem:[#allocation7 + $0x8] sm:$0xff]
    %v646 = vld [vmem:[#allocation7 + $0x10] sm:$0xff]
    %v647 = vld [vmem:[#allocation7 + $0x18] sm:$0xff]
    %v648 = vld [vmem:[#allocation7 + $0x20] sm:$0xff]
    %v649 = vld [vmem:[#allocation7 + $0x28] sm:$0xff]
    %v650 = vld [vmem:[#allocation7 + $0x30] sm:$0xff]
    %v651 = vld [vmem:[#allocation7 + $0x38] sm:$0xff]
    %v652 = vld [vmem:[#allocation7 + $0x40] sm:$0xff]
    %v653 = vld [vmem:[#allocation7 + $0x48] sm:$0xff]
    %v654 = vld [vmem:[#allocation7 + $0x50] sm:$0xff]
    %v655 = vld [vmem:[#allocation7 + $0x58] sm:$0xff]
    %v656 = vld [vmem:[#allocation7 + $0x60] sm:$0xff]
    %v657 = vld [vmem:[#allocation7 + $0x68] sm:$0xff]
    %v658 = vld [vmem:[#allocation7 + $0x70] sm:$0xff]
    %v659 = vld [vmem:[#allocation7 + $0x78] sm:$0xff]
    %v660 = vld [vmem:[%s5] sm:$0x1]
    %v662 = vlaneseq
    %v663 = vshrl.u32 %v662, 7
    %v664 = vsub.s32 0, %v663
    %v665 = vrot.slane %v660, %v664
    %667 = vmatprep.subr.mxu0 0.0
    %668 = vmatpush1.msra.mxu0 %v644
    %669 = vmatprep.subr.mxu0 0.0
    %670 = vmatpush1.msra.mxu0 %v645
    %671 = vmatprep.subr.mxu0 0.0
    %672 = vmatpush1.msra.mxu0 %v646
    %673 = vmatprep.subr.mxu0 0.0
    %674 = vmatpush1.msra.mxu0 %v647
    %675 = vmatprep.subr.mxu0 0.0
    %676 = vmatpush1.msra.mxu0 %v648
    %677 = vmatprep.subr.mxu0 0.0
    %678 = vmatpush1.msra.mxu0 %v649
    %679 = vmatprep.subr.mxu0 0.0
    %680 = vmatpush1.msra.mxu0 %v650
    %681 = vmatprep.subr.mxu0 0.0
    %682 = vmatpush1.msra.mxu0 %v651
    %683 = vmatprep.subr.mxu0 0.0
    %684 = vmatpush1.msra.mxu0 %v652
    %685 = vmatprep.subr.mxu0 0.0
    %686 = vmatpush1.msra.mxu0 %v653
    %687 = vmatprep.subr.mxu0 0.0
    %688 = vmatpush1.msra.mxu0 %v654
    %689 = vmatprep.subr.mxu0 0.0
    %690 = vmatpush1.msra.mxu0 %v655
    %691 = vmatprep.subr.mxu0 0.0
    %692 = vmatpush1.msra.mxu0 %v656
    %693 = vmatprep.subr.mxu0 0.0
    %694 = vmatpush1.msra.mxu0 %v657
    %695 = vmatprep.subr.mxu0 0.0
    %696 = vmatpush1.msra.mxu0 %v658
    %697 = vmatprep.subr.mxu0 0.0
    %698 = vmatpush1.msra.mxu0 %v659
    %699 = vmatprep.subr.mxu0 0.0
    %700 = vmatpush1.msra.mxu0 0.0
    %701 = vmatprep.subr.mxu0 0.0
    %702 = vmatpush1.msra.mxu0 0.0
    %703 = vmatprep.subr.mxu0 0.0
    %704 = vmatpush1.msra.mxu0 0.0
    %705 = vmatprep.subr.mxu0 0.0
    %706 = vmatpush1.msra.mxu0 0.0
    %707 = vmatprep.subr.mxu0 0.0
    %708 = vmatpush1.msra.mxu0 0.0
    %709 = vmatprep.subr.mxu0 0.0
    %710 = vmatpush1.msra.mxu0 0.0
    %711 = vmatprep.subr.mxu0 0.0
    %712 = vmatpush1.msra.mxu0 0.0
    %713 = vmatprep.subr.mxu0 0.0
    %714 = vmatpush1.msra.mxu0 0.0
    %715 = vmatprep.subr.mxu0 0.0
    %716 = vmatpush1.msra.mxu0 0.0
    %717 = vmatprep.subr.mxu0 0.0
    %718 = vmatpush1.msra.mxu0 0.0
    %719 = vmatprep.subr.mxu0 0.0
    %720 = vmatpush1.msra.mxu0 0.0
    %721 = vmatprep.subr.mxu0 0.0
    %722 = vmatpush1.msra.mxu0 0.0
    %723 = vmatprep.subr.mxu0 0.0
    %724 = vmatpush1.msra.mxu0 0.0
    %725 = vmatprep.subr.mxu0 0.0
    %726 = vmatpush1.msra.mxu0 0.0
    %727 = vmatprep.subr.mxu0 0.0
    %728 = vmatpush1.msra.mxu0 0.0
    %729 = vmatprep.subr.mxu0 0.0
    %730 = vmatpush1.msra.mxu0 0.0
    %731 = vmatprep.mubr.f32.mxu0 0.0
    %732 = vmatmul.mubr.f32.gmra.mrb[0].mxu0 %v643
    %v733 = vpop.f32.mrb[0].mxu0
    %v734 = vadd.f32 %v665, %v733
    %v735 = vpop.f32.mrb[0].mxu0
    %736 = vdwg.mxu0
    %737 = vst [vmem:[#allocation9] sm:$0xff] %v734
    // Predicated region
    $region34: #{tpu_custom_call.1} parent=1 // pred_check
      _
    $region35: #{tpu_custom_call.1} parent=1 // pred_check_branch
      %739 = sbr.rel (0) target = $region37
    $region36: #{tpu_custom_call.1} parent=1 // pred_region
      %s741 = ssub.s32 128, 128
      %742 = vsyncadd [#allocation6], %s741
      %s744 = sshll.u32 [#allocation9], 4
      %s745 = int_to_ptr.vmem [resolvable:$true] %s744
      %747 = dma.vmem_to_hbm [thread:$0]  %s745, 128, %s6, [#allocation6]
    $region37: #{tpu_custom_call.1} parent=1 // pred_fallthru
      _
    // Predicated region
    $region38: #{tpu_custom_call.1} parent=1 // pred_check
      _
    $region39: #{tpu_custom_call.1} parent=1 // pred_check_branch
      %749 = sbr.rel (0) target = $region41
    $region40: #{tpu_custom_call.1} parent=1 // pred_region
      %750 = dma.done [#allocation6], 128
    $region41: #{tpu_custom_call.1} parent=1 // pred_fallthru
      _
    %751 = vsyncpa [#allocation5], 1
    %752 = vsyncpa [#allocation8], 1
    %753 = vsyncpa [#allocation6], 1

</llo_original>
